<compile_context>
chip_gen: v7x
topology: tpu7x:2x2x1
jax: 0.10.0
libtpu: 0.0.40
codegen_flags: <defaults>
</compile_context>

<pallas_src>
import jax
import jax.numpy as jnp
from jax.experimental import pallas as pl
from jax.experimental.pallas import tpu as pltpu


def _cdiv(a, b):
    return -(-a // b)


def _make_vpu_kernel(C):
    """Small-C path: unrolled scalar*slab FMAs on dense (S, 128) slabs.

    x_ref/o_ref: (1, C, S, 128) VMEM; w_ref: (C, C) SMEM; b_ref: (C,) SMEM.
    """

    def kernel(x_ref, w_ref, b_ref, o_ref):
        for c in range(C):
            # residual + bias first, then the channel mix; everything stays
            # a dense (S, 128) f32 slab.
            acc = x_ref[0, c].astype(jnp.float32) + b_ref[c]
            for k in range(C):
                acc = acc + w_ref[c, k] * x_ref[0, k].astype(jnp.float32)
            o_ref[0, c] = acc.astype(o_ref.dtype)

    return kernel


def _mxu_kernel(x_ref, w_ref, b_ref, o_ref):
    """Large-C path: MXU matmul over the channel dim.

    x_ref/o_ref: (1, C, tl) VMEM; w_ref: (C, C) VMEM; b_ref: (C, 1) VMEM.
    """
    x = x_ref[0]                                         # (C, tl), native dtype
    w = w_ref[...]
    if w.dtype != x.dtype:
        w = w.astype(x.dtype)
    fn = jnp.dot(w, x, preferred_element_type=jnp.float32)          # (C, tl) f32
    out = x.astype(jnp.float32) + fn + b_ref[...].astype(jnp.float32)
    o_ref[0] = out.astype(o_ref.dtype)


def residual_pointwise(x_nchw, w, b, *, block_bytes=4 << 20, vpu_max_c=8):
    """out = x + conv1x1(x; w, b), input/output in NCHW. w is (C_out, C_in)."""
    N, C, H, W = x_nchw.shape
    L = H * W
    itemsize = jnp.dtype(x_nchw.dtype).itemsize

    # Lane-align the spatial axis: pad at most 127 lanes (no-op when aligned).
    R = _cdiv(L, 128)
    L_pad = R * 128
    x3 = x_nchw.reshape(N, C, L)
    if L_pad != L:
        x3 = jnp.pad(x3, ((0, 0), (0, 0), (0, L_pad - L)))

    use_vpu = C <= vpu_max_c

    if use_vpu:
        # (N, C, R, 128): spatial occupies both the sublane (R) and lane (128)
        # axes, so every slab the kernel touches is dense.
        x_in = x3.reshape(N, C, R, 128)
        row_bytes = C * 128 * 4                           # f32 accounting
        S_target = max(8, (block_bytes // row_bytes) // 8 * 8)
        S = R if R <= S_target else S_target
        grid_j = _cdiv(R, S)
        if N * grid_j < 2 and R >= 16:                    # keep both v7x TCs busy
            S = max(8, (R // 2) // 8 * 8)
            grid_j = _cdiv(R, S)
        grid = (N, grid_j)

        kernel = _make_vpu_kernel(C)
        in_specs = [
            pl.BlockSpec((1, C, S, 128), lambda n, j: (n, 0, j, 0)),
            pl.BlockSpec(memory_space=pltpu.MemorySpace.SMEM),   # w (C, C)
            pl.BlockSpec(memory_space=pltpu.MemorySpace.SMEM),   # b (C,)
        ]
        out_specs = pl.BlockSpec((1, C, S, 128), lambda n, j: (n, 0, j, 0))
        out_shape = jax.ShapeDtypeStruct((N, C, R, 128), x3.dtype)
        args = (x_in, w, b)
        block_vmem = C * S * 128 * 4
    else:
        # Lane-dense 3D layout; C >= 8 already fills the sublanes.
        x_in = x3
        col_bytes = C * 4                                 # f32 accounting
        tl_target = max(128, (block_bytes // col_bytes) // 128 * 128)
        tl = L_pad if L_pad <= tl_target else tl_target
        grid_j = _cdiv(L_pad, tl)
        if N * grid_j < 2 and L_pad >= 256:               # keep both v7x TCs busy
            tl = max(128, (L_pad // 2) // 128 * 128)
            grid_j = _cdiv(L_pad, tl)
        grid = (N, grid_j)

        kernel = _mxu_kernel
        in_specs = [
            pl.BlockSpec((1, C, tl), lambda n, j: (n, 0, j)),
            pl.BlockSpec((C, C), lambda n, j: (0, 0)),
            pl.BlockSpec((C, 1), lambda n, j: (0, 0)),
        ]
        out_specs = pl.BlockSpec((1, C, tl), lambda n, j: (n, 0, j))
        out_shape = jax.ShapeDtypeStruct((N, C, L_pad), x3.dtype)
        args = (x_in, w, b.reshape(C, 1))
        block_vmem = C * tl * 4

    # VMEM budget: double-buffered in + out (4x) plus f32 temporaries (2x),
    # counted at 4 bytes/elem, plus params and slack; capped for v7x (64 MiB/TC).
    vmem_needed = 6 * block_vmem + C * C * 4 + C * 4 + (2 << 20)
    vmem_limit = int(min(48 << 20, max(vmem_needed, 16 << 20)))

    flops = int(2 * N * L_pad * C * (C + 1))
    bytes_accessed = int(2 * N * C * L_pad * itemsize + C * C * 4 + C * 4)

    out = pl.pallas_call(
        kernel,
        out_shape=out_shape,
        grid=grid,
        in_specs=in_specs,
        out_specs=out_specs,
        compiler_params=pltpu.CompilerParams(
            dimension_semantics=("parallel", "parallel"),
            vmem_limit_bytes=vmem_limit,
        ),
        cost_estimate=pl.CostEstimate(
            flops=flops, transcendentals=0, bytes_accessed=bytes_accessed),
    )(*args)

    out3 = out.reshape(N, C, L_pad)
    if L_pad != L:
        out3 = out3[:, :, :L]
    return out3.reshape(N, C, H, W)


if __name__ == "__main__":
    key = jax.random.PRNGKey(0)
    kx, kw, kb = jax.random.split(key, 3)

    N, C, H, W = 2, 4, 16, 16
    x = jax.random.normal(kx, (N, C, H, W), dtype=jnp.float32)

    # Deterministic synthetic parameters for fn = 1x1 conv: w is (C_out, C_in).
    w = jax.random.normal(kw, (C, C), dtype=jnp.float32) * 0.1
    b = jax.random.normal(kb, (C,), dtype=jnp.float32) * 0.1

    out = jax.block_until_ready(residual_pointwise(x, w, b))

    # Pure-JAX reference: x + fn(x) with fn = 1x1 conv (channel mixing).
    ref = x + (jnp.einsum("ck,nkhw->nchw", w, x) + b[None, :, None, None])

    assert out.shape == x.shape and out.dtype == x.dtype
    assert jnp.allclose(out, ref, atol=1e-5, rtol=1e-5)
    print("KERNEL_OK")
</pallas_src>

<mosaic_0001>
module attributes {stable_mosaic.version = 11 : i64} {
  func.func @kernel(%arg0: i32, %arg1: i32, %arg2: memref<1x4x2x128xf32, #tpu.memory_space<vmem>>, %arg3: memref<4x4xf32, #tpu.memory_space<smem>>, %arg4: memref<4xf32, #tpu.memory_space<smem>>, %arg5: memref<1x4x2x128xf32, #tpu.memory_space<vmem>>) attributes {dimension_semantics = [#tpu.dimension_semantics<parallel>, #tpu.dimension_semantics<parallel>], iteration_bounds = array<i64: 2, 1>, scalar_prefetch = 0 : i64, scratch_operands = 0 : i64, tpu.core_type = #tpu.core_type<tc>, window_params = [{transform_indices = @transform_0, window_bounds = array<i64: 1, 4, 2, 128>}, {transform_indices = @transform_1, window_bounds = array<i64: 4, 4>}, {transform_indices = @transform_2, window_bounds = array<i64: 4>}, {transform_indices = @transform_3, window_bounds = array<i64: 1, 4, 2, 128>}]} {
    %c0 = arith.constant 0 : index
    %c0_0 = arith.constant 0 : index
    %c0_1 = arith.constant 0 : index
    %c0_2 = arith.constant 0 : index
    %0 = vector.load %arg2[%c0, %c0_0, %c0_1, %c0_2] : memref<1x4x2x128xf32, #tpu.memory_space<vmem>>, vector<1x1x2x128xf32>
    %1 = vector.shape_cast %0 : vector<1x1x2x128xf32> to vector<2x128xf32>
    %c0_3 = arith.constant 0 : index
    %2 = memref.load %arg4[%c0_3] : memref<4xf32, #tpu.memory_space<smem>>
    %3 = vector.broadcast %2 : f32 to vector<2x128xf32>
    %4 = arith.addf %1, %3 : vector<2x128xf32>
    %c0_4 = arith.constant 0 : index
    %c0_5 = arith.constant 0 : index
    %5 = memref.load %arg3[%c0_4, %c0_5] : memref<4x4xf32, #tpu.memory_space<smem>>
    %c0_6 = arith.constant 0 : index
    %c0_7 = arith.constant 0 : index
    %c0_8 = arith.constant 0 : index
    %c0_9 = arith.constant 0 : index
    %6 = vector.load %arg2[%c0_6, %c0_7, %c0_8, %c0_9] : memref<1x4x2x128xf32, #tpu.memory_space<vmem>>, vector<1x1x2x128xf32>
    %7 = vector.shape_cast %6 : vector<1x1x2x128xf32> to vector<2x128xf32>
    %8 = vector.broadcast %5 : f32 to vector<2x128xf32>
    %9 = arith.mulf %8, %7 : vector<2x128xf32>
    %10 = arith.addf %4, %9 : vector<2x128xf32>
    %c0_10 = arith.constant 0 : index
    %c1 = arith.constant 1 : index
    %11 = memref.load %arg3[%c0_10, %c1] : memref<4x4xf32, #tpu.memory_space<smem>>
    %c0_11 = arith.constant 0 : index
    %c1_12 = arith.constant 1 : index
    %c0_13 = arith.constant 0 : index
    %c0_14 = arith.constant 0 : index
    %12 = vector.load %arg2[%c0_11, %c1_12, %c0_13, %c0_14] : memref<1x4x2x128xf32, #tpu.memory_space<vmem>>, vector<1x1x2x128xf32>
    %13 = vector.shape_cast %12 : vector<1x1x2x128xf32> to vector<2x128xf32>
    %14 = vector.broadcast %11 : f32 to vector<2x128xf32>
    %15 = arith.mulf %14, %13 : vector<2x128xf32>
    %16 = arith.addf %10, %15 : vector<2x128xf32>
    %c0_15 = arith.constant 0 : index
    %c2 = arith.constant 2 : index
    %17 = memref.load %arg3[%c0_15, %c2] : memref<4x4xf32, #tpu.memory_space<smem>>
    %c0_16 = arith.constant 0 : index
    %c2_17 = arith.constant 2 : index
    %c0_18 = arith.constant 0 : index
    %c0_19 = arith.constant 0 : index
    %18 = vector.load %arg2[%c0_16, %c2_17, %c0_18, %c0_19] : memref<1x4x2x128xf32, #tpu.memory_space<vmem>>, vector<1x1x2x128xf32>
    %19 = vector.shape_cast %18 : vector<1x1x2x128xf32> to vector<2x128xf32>
    %20 = vector.broadcast %17 : f32 to vector<2x128xf32>
    %21 = arith.mulf %20, %19 : vector<2x128xf32>
    %22 = arith.addf %16, %21 : vector<2x128xf32>
    %c0_20 = arith.constant 0 : index
    %c3 = arith.constant 3 : index
    %23 = memref.load %arg3[%c0_20, %c3] : memref<4x4xf32, #tpu.memory_space<smem>>
    %c0_21 = arith.constant 0 : index
    %c3_22 = arith.constant 3 : index
    %c0_23 = arith.constant 0 : index
    %c0_24 = arith.constant 0 : index
    %24 = vector.load %arg2[%c0_21, %c3_22, %c0_23, %c0_24] : memref<1x4x2x128xf32, #tpu.memory_space<vmem>>, vector<1x1x2x128xf32>
    %25 = vector.shape_cast %24 : vector<1x1x2x128xf32> to vector<2x128xf32>
    %26 = vector.broadcast %23 : f32 to vector<2x128xf32>
    %27 = arith.mulf %26, %25 : vector<2x128xf32>
    %28 = arith.addf %22, %27 : vector<2x128xf32>
    %c0_25 = arith.constant 0 : index
    %c0_26 = arith.constant 0 : index
    %c0_27 = arith.constant 0 : index
    %c0_28 = arith.constant 0 : index
    %29 = vector.load %arg5[%c0_25, %c0_26, %c0_27, %c0_28] : memref<1x4x2x128xf32, #tpu.memory_space<vmem>>, vector<1x1x2x128xf32>
    %30 = vector.shape_cast %29 : vector<1x1x2x128xf32> to vector<2x128xf32>
    %31 = vector.shape_cast %28 : vector<2x128xf32> to vector<1x1x2x128xf32>
    tpu.vector_store %arg5[%c0_25, %c0_26, %c0_27, %c0_28], %31 {strides = array<i32>} : memref<1x4x2x128xf32, #tpu.memory_space<vmem>>, vector<1x1x2x128xf32>,
    %c0_29 = arith.constant 0 : index
    %c1_30 = arith.constant 1 : index
    %c0_31 = arith.constant 0 : index
    %c0_32 = arith.constant 0 : index
    %32 = vector.load %arg2[%c0_29, %c1_30, %c0_31, %c0_32] : memref<1x4x2x128xf32, #tpu.memory_space<vmem>>, vector<1x1x2x128xf32>
    %33 = vector.shape_cast %32 : vector<1x1x2x128xf32> to vector<2x128xf32>
    %c1_33 = arith.constant 1 : index
    %34 = memref.load %arg4[%c1_33] : memref<4xf32, #tpu.memory_space<smem>>
    %35 = vector.broadcast %34 : f32 to vector<2x128xf32>
    %36 = arith.addf %33, %35 : vector<2x128xf32>
    %c1_34 = arith.constant 1 : index
    %c0_35 = arith.constant 0 : index
    %37 = memref.load %arg3[%c1_34, %c0_35] : memref<4x4xf32, #tpu.memory_space<smem>>
    %c0_36 = arith.constant 0 : index
    %c0_37 = arith.constant 0 : index
    %c0_38 = arith.constant 0 : index
    %c0_39 = arith.constant 0 : index
    %38 = vector.load %arg2[%c0_36, %c0_37, %c0_38, %c0_39] : memref<1x4x2x128xf32, #tpu.memory_space<vmem>>, vector<1x1x2x128xf32>
    %39 = vector.shape_cast %38 : vector<1x1x2x128xf32> to vector<2x128xf32>
    %40 = vector.broadcast %37 : f32 to vector<2x128xf32>
    %41 = arith.mulf %40, %39 : vector<2x128xf32>
    %42 = arith.addf %36, %41 : vector<2x128xf32>
    %c1_40 = arith.constant 1 : index
    %c1_41 = arith.constant 1 : index
    %43 = memref.load %arg3[%c1_40, %c1_41] : memref<4x4xf32, #tpu.memory_space<smem>>
    %c0_42 = arith.constant 0 : index
    %c1_43 = arith.constant 1 : index
    %c0_44 = arith.constant 0 : index
    %c0_45 = arith.constant 0 : index
    %44 = vector.load %arg2[%c0_42, %c1_43, %c0_44, %c0_45] : memref<1x4x2x128xf32, #tpu.memory_space<vmem>>, vector<1x1x2x128xf32>
    %45 = vector.shape_cast %44 : vector<1x1x2x128xf32> to vector<2x128xf32>
    %46 = vector.broadcast %43 : f32 to vector<2x128xf32>
    %47 = arith.mulf %46, %45 : vector<2x128xf32>
    %48 = arith.addf %42, %47 : vector<2x128xf32>
    %c1_46 = arith.constant 1 : index
    %c2_47 = arith.constant 2 : index
    %49 = memref.load %arg3[%c1_46, %c2_47] : memref<4x4xf32, #tpu.memory_space<smem>>
    %c0_48 = arith.constant 0 : index
    %c2_49 = arith.constant 2 : index
    %c0_50 = arith.constant 0 : index
    %c0_51 = arith.constant 0 : index
    %50 = vector.load %arg2[%c0_48, %c2_49, %c0_50, %c0_51] : memref<1x4x2x128xf32, #tpu.memory_space<vmem>>, vector<1x1x2x128xf32>
    %51 = vector.shape_cast %50 : vector<1x1x2x128xf32> to vector<2x128xf32>
    %52 = vector.broadcast %49 : f32 to vector<2x128xf32>
    %53 = arith.mulf %52, %51 : vector<2x128xf32>
    %54 = arith.addf %48, %53 : vector<2x128xf32>
    %c1_52 = arith.constant 1 : index
    %c3_53 = arith.constant 3 : index
    %55 = memref.load %arg3[%c1_52, %c3_53] : memref<4x4xf32, #tpu.memory_space<smem>>
    %c0_54 = arith.constant 0 : index
    %c3_55 = arith.constant 3 : index
    %c0_56 = arith.constant 0 : index
    %c0_57 = arith.constant 0 : index
    %56 = vector.load %arg2[%c0_54, %c3_55, %c0_56, %c0_57] : memref<1x4x2x128xf32, #tpu.memory_space<vmem>>, vector<1x1x2x128xf32>
    %57 = vector.shape_cast %56 : vector<1x1x2x128xf32> to vector<2x128xf32>
    %58 = vector.broadcast %55 : f32 to vector<2x128xf32>
    %59 = arith.mulf %58, %57 : vector<2x128xf32>
    %60 = arith.addf %54, %59 : vector<2x128xf32>
    %c0_58 = arith.constant 0 : index
    %c1_59 = arith.constant 1 : index
    %c0_60 = arith.constant 0 : index
    %c0_61 = arith.constant 0 : index
    %61 = vector.load %arg5[%c0_58, %c1_59, %c0_60, %c0_61] : memref<1x4x2x128xf32, #tpu.memory_space<vmem>>, vector<1x1x2x128xf32>
    %62 = vector.shape_cast %61 : vector<1x1x2x128xf32> to vector<2x128xf32>
    %63 = vector.shape_cast %60 : vector<2x128xf32> to vector<1x1x2x128xf32>
    tpu.vector_store %arg5[%c0_58, %c1_59, %c0_60, %c0_61], %63 {strides = array<i32>} : memref<1x4x2x128xf32, #tpu.memory_space<vmem>>, vector<1x1x2x128xf32>,
    %c0_62 = arith.constant 0 : index
    %c2_63 = arith.constant 2 : index
    %c0_64 = arith.constant 0 : index
    %c0_65 = arith.constant 0 : index
    %64 = vector.load %arg2[%c0_62, %c2_63, %c0_64, %c0_65] : memref<1x4x2x128xf32, #tpu.memory_space<vmem>>, vector<1x1x2x128xf32>
    %65 = vector.shape_cast %64 : vector<1x1x2x128xf32> to vector<2x128xf32>
    %c2_66 = arith.constant 2 : index
    %66 = memref.load %arg4[%c2_66] : memref<4xf32, #tpu.memory_space<smem>>
    %67 = vector.broadcast %66 : f32 to vector<2x128xf32>
    %68 = arith.addf %65, %67 : vector<2x128xf32>
    %c2_67 = arith.constant 2 : index
    %c0_68 = arith.constant 0 : index
    %69 = memref.load %arg3[%c2_67, %c0_68] : memref<4x4xf32, #tpu.memory_space<smem>>
    %c0_69 = arith.constant 0 : index
    %c0_70 = arith.constant 0 : index
    %c0_71 = arith.constant 0 : index
    %c0_72 = arith.constant 0 : index
    %70 = vector.load %arg2[%c0_69, %c0_70, %c0_71, %c0_72] : memref<1x4x2x128xf32, #tpu.memory_space<vmem>>, vector<1x1x2x128xf32>
    %71 = vector.shape_cast %70 : vector<1x1x2x128xf32> to vector<2x128xf32>
    %72 = vector.broadcast %69 : f32 to vector<2x128xf32>
    %73 = arith.mulf %72, %71 : vector<2x128xf32>
    %74 = arith.addf %68, %73 : vector<2x128xf32>
    %c2_73 = arith.constant 2 : index
    %c1_74 = arith.constant 1 : index
    %75 = memref.load %arg3[%c2_73, %c1_74] : memref<4x4xf32, #tpu.memory_space<smem>>
    %c0_75 = arith.constant 0 : index
    %c1_76 = arith.constant 1 : index
    %c0_77 = arith.constant 0 : index
    %c0_78 = arith.constant 0 : index
    %76 = vector.load %arg2[%c0_75, %c1_76, %c0_77, %c0_78] : memref<1x4x2x128xf32, #tpu.memory_space<vmem>>, vector<1x1x2x128xf32>
    %77 = vector.shape_cast %76 : vector<1x1x2x128xf32> to vector<2x128xf32>
    %78 = vector.broadcast %75 : f32 to vector<2x128xf32>
    %79 = arith.mulf %78, %77 : vector<2x128xf32>
    %80 = arith.addf %74, %79 : vector<2x128xf32>
    %c2_79 = arith.constant 2 : index
    %c2_80 = arith.constant 2 : index
    %81 = memref.load %arg3[%c2_79, %c2_80] : memref<4x4xf32, #tpu.memory_space<smem>>
    %c0_81 = arith.constant 0 : index
    %c2_82 = arith.constant 2 : index
    %c0_83 = arith.constant 0 : index
    %c0_84 = arith.constant 0 : index
    %82 = vector.load %arg2[%c0_81, %c2_82, %c0_83, %c0_84] : memref<1x4x2x128xf32, #tpu.memory_space<vmem>>, vector<1x1x2x128xf32>
    %83 = vector.shape_cast %82 : vector<1x1x2x128xf32> to vector<2x128xf32>
    %84 = vector.broadcast %81 : f32 to vector<2x128xf32>
    %85 = arith.mulf %84, %83 : vector<2x128xf32>
    %86 = arith.addf %80, %85 : vector<2x128xf32>
    %c2_85 = arith.constant 2 : index
    %c3_86 = arith.constant 3 : index
    %87 = memref.load %arg3[%c2_85, %c3_86] : memref<4x4xf32, #tpu.memory_space<smem>>
    %c0_87 = arith.constant 0 : index
    %c3_88 = arith.constant 3 : index
    %c0_89 = arith.constant 0 : index
    %c0_90 = arith.constant 0 : index
    %88 = vector.load %arg2[%c0_87, %c3_88, %c0_89, %c0_90] : memref<1x4x2x128xf32, #tpu.memory_space<vmem>>, vector<1x1x2x128xf32>
    %89 = vector.shape_cast %88 : vector<1x1x2x128xf32> to vector<2x128xf32>
    %90 = vector.broadcast %87 : f32 to vector<2x128xf32>
    %91 = arith.mulf %90, %89 : vector<2x128xf32>
    %92 = arith.addf %86, %91 : vector<2x128xf32>
    %c0_91 = arith.constant 0 : index
    %c2_92 = arith.constant 2 : index
    %c0_93 = arith.constant 0 : index
    %c0_94 = arith.constant 0 : index
    %93 = vector.load %arg5[%c0_91, %c2_92, %c0_93, %c0_94] : memref<1x4x2x128xf32, #tpu.memory_space<vmem>>, vector<1x1x2x128xf32>
    %94 = vector.shape_cast %93 : vector<1x1x2x128xf32> to vector<2x128xf32>
    %95 = vector.shape_cast %92 : vector<2x128xf32> to vector<1x1x2x128xf32>
    tpu.vector_store %arg5[%c0_91, %c2_92, %c0_93, %c0_94], %95 {strides = array<i32>} : memref<1x4x2x128xf32, #tpu.memory_space<vmem>>, vector<1x1x2x128xf32>,
    %c0_95 = arith.constant 0 : index
    %c3_96 = arith.constant 3 : index
    %c0_97 = arith.constant 0 : index
    %c0_98 = arith.constant 0 : index
    %96 = vector.load %arg2[%c0_95, %c3_96, %c0_97, %c0_98] : memref<1x4x2x128xf32, #tpu.memory_space<vmem>>, vector<1x1x2x128xf32>
    %97 = vector.shape_cast %96 : vector<1x1x2x128xf32> to vector<2x128xf32>
    %c3_99 = arith.constant 3 : index
    %98 = memref.load %arg4[%c3_99] : memref<4xf32, #tpu.memory_space<smem>>
    %99 = vector.broadcast %98 : f32 to vector<2x128xf32>
    %100 = arith.addf %97, %99 : vector<2x128xf32>
    %c3_100 = arith.constant 3 : index
    %c0_101 = arith.constant 0 : index
    %101 = memref.load %arg3[%c3_100, %c0_101] : memref<4x4xf32, #tpu.memory_space<smem>>
    %c0_102 = arith.constant 0 : index
    %c0_103 = arith.constant 0 : index
    %c0_104 = arith.constant 0 : index
    %c0_105 = arith.constant 0 : index
    %102 = vector.load %arg2[%c0_102, %c0_103, %c0_104, %c0_105] : memref<1x4x2x128xf32, #tpu.memory_space<vmem>>, vector<1x1x2x128xf32>
    %103 = vector.shape_cast %102 : vector<1x1x2x128xf32> to vector<2x128xf32>
    %104 = vector.broadcast %101 : f32 to vector<2x128xf32>
    %105 = arith.mulf %104, %103 : vector<2x128xf32>
    %106 = arith.addf %100, %105 : vector<2x128xf32>
    %c3_106 = arith.constant 3 : index
    %c1_107 = arith.constant 1 : index
    %107 = memref.load %arg3[%c3_106, %c1_107] : memref<4x4xf32, #tpu.memory_space<smem>>
    %c0_108 = arith.constant 0 : index
    %c1_109 = arith.constant 1 : index
    %c0_110 = arith.constant 0 : index
    %c0_111 = arith.constant 0 : index
    %108 = vector.load %arg2[%c0_108, %c1_109, %c0_110, %c0_111] : memref<1x4x2x128xf32, #tpu.memory_space<vmem>>, vector<1x1x2x128xf32>
    %109 = vector.shape_cast %108 : vector<1x1x2x128xf32> to vector<2x128xf32>
    %110 = vector.broadcast %107 : f32 to vector<2x128xf32>
    %111 = arith.mulf %110, %109 : vector<2x128xf32>
    %112 = arith.addf %106, %111 : vector<2x128xf32>
    %c3_112 = arith.constant 3 : index
    %c2_113 = arith.constant 2 : index
    %113 = memref.load %arg3[%c3_112, %c2_113] : memref<4x4xf32, #tpu.memory_space<smem>>
    %c0_114 = arith.constant 0 : index
    %c2_115 = arith.constant 2 : index
    %c0_116 = arith.constant 0 : index
    %c0_117 = arith.constant 0 : index
    %114 = vector.load %arg2[%c0_114, %c2_115, %c0_116, %c0_117] : memref<1x4x2x128xf32, #tpu.memory_space<vmem>>, vector<1x1x2x128xf32>
    %115 = vector.shape_cast %114 : vector<1x1x2x128xf32> to vector<2x128xf32>
    %116 = vector.broadcast %113 : f32 to vector<2x128xf32>
    %117 = arith.mulf %116, %115 : vector<2x128xf32>
    %118 = arith.addf %112, %117 : vector<2x128xf32>
    %c3_118 = arith.constant 3 : index
    %c3_119 = arith.constant 3 : index
    %119 = memref.load %arg3[%c3_118, %c3_119] : memref<4x4xf32, #tpu.memory_space<smem>>
    %c0_120 = arith.constant 0 : index
    %c3_121 = arith.constant 3 : index
    %c0_122 = arith.constant 0 : index
    %c0_123 = arith.constant 0 : index
    %120 = vector.load %arg2[%c0_120, %c3_121, %c0_122, %c0_123] : memref<1x4x2x128xf32, #tpu.memory_space<vmem>>, vector<1x1x2x128xf32>
    %121 = vector.shape_cast %120 : vector<1x1x2x128xf32> to vector<2x128xf32>
    %122 = vector.broadcast %119 : f32 to vector<2x128xf32>
    %123 = arith.mulf %122, %121 : vector<2x128xf32>
    %124 = arith.addf %118, %123 : vector<2x128xf32>
    %c0_124 = arith.constant 0 : index
    %c3_125 = arith.constant 3 : index
    %c0_126 = arith.constant 0 : index
    %c0_127 = arith.constant 0 : index
    %125 = vector.load %arg5[%c0_124, %c3_125, %c0_126, %c0_127] : memref<1x4x2x128xf32, #tpu.memory_space<vmem>>, vector<1x1x2x128xf32>
    %126 = vector.shape_cast %125 : vector<1x1x2x128xf32> to vector<2x128xf32>
    %127 = vector.shape_cast %124 : vector<2x128xf32> to vector<1x1x2x128xf32>
    tpu.vector_store %arg5[%c0_124, %c3_125, %c0_126, %c0_127], %127 {strides = array<i32>} : memref<1x4x2x128xf32, #tpu.memory_space<vmem>>, vector<1x1x2x128xf32>,
    return
  }
  func.func @transform_0(%arg0: i32, %arg1: i32) -> (i32, i32, i32, i32) {
    %c0_i32 = arith.constant 0 : i32
    %c0_i32_0 = arith.constant 0 : i32
    %c0_i32_1 = arith.constant 0 : i32
    return %arg0, %c0_i32, %arg1, %c0_i32_0 : i32, i32, i32, i32
  }
  func.func @transform_1(%arg0: i32, %arg1: i32) -> (i32, i32) {
    %c0_i32 = arith.constant 0 : i32
    %c0_i32_0 = arith.constant 0 : i32
    %c0_i32_1 = arith.constant 0 : i32
    return %c0_i32, %c0_i32_0 : i32, i32
  }
  func.func @transform_2(%arg0: i32, %arg1: i32) -> i32 {
    %c0_i32 = arith.constant 0 : i32
    %c0_i32_0 = arith.constant 0 : i32
    return %c0_i32 : i32
  }
  func.func @transform_3(%arg0: i32, %arg1: i32) -> (i32, i32, i32, i32) {
    %c0_i32 = arith.constant 0 : i32
    %c0_i32_0 = arith.constant 0 : i32
    %c0_i32_1 = arith.constant 0 : i32
    return %arg0, %c0_i32, %arg1, %c0_i32_0 : i32, i32, i32, i32
  }
}

</mosaic_0001>

<llo_original>
// kernel: tpu_custom_call.1
$region0: #{tpu_custom_call.1}
  #allocation0 [shape = 'u32[]', space=smem, size = 0x4, offset = 0x4, fixed_abs, tag = 'smem constant byte address 0x4 - core index']
  #allocation1 [shape = 'u32[144,128]{1,0:T(1,128)}', space=vmem, size = 0x12000, scoped, tag = 'internal scratch']
  %s0 = inlined_call_operand.hbm [shape: f32[2,4,2,128], index: 0, kind: input, shape index: {}]
  %s1 = inlined_call_operand.hbm [shape: f32[4,4], index: 1, kind: input, shape index: {}]
  %s2 = inlined_call_operand.vmem [shape: f32[4], index: 2, kind: input, shape index: {}]
  %s3 = inlined_call_operand.hbm [shape: f32[2,4,2,128], index: 3, kind: output, shape index: {}]
  %s4 = sld [smem:[#allocation0]]
  $region57: #{tpu_custom_call.1} parent=0
    _
  %s6 = ssub.s32 1, %s4
  %s7 = scalar_select 0, %s6, %s4
  $region1: #{tpu_custom_call.1} parent=0
    #allocation2 [shape = 'u8[8192]{0}', space=vmem, size = 0x2000, scoped, tag = 'input window, operand 0']
    #allocation3 [shape = 's32[2]{0}', space=sflag, size = 0x8, scoped, tag = 'scoped memory for tpu_custom_call.1']
    #allocation4 [shape = 's32[2]{0}', space=sflag, size = 0x8, scoped, tag = 'scoped memory for tpu_custom_call.1']
    #allocation5 [shape = 's32[2]{0}', space=sflag, size = 0x8, scoped, tag = 'scoped memory for tpu_custom_call.1']
    #allocation6 [shape = 's32[2]{0}', space=sflag, size = 0x8, scoped, tag = 'scoped memory for tpu_custom_call.1']
    #allocation7 [shape = 'u8[2048]{0}', space=smem, size = 0x800, scoped, tag = 'input window, operand 1, single buffered']
    #allocation8 [shape = 'u8[512]{0}', space=smem, size = 0x200, scoped, tag = 'input window, operand 2, single buffered']
    #allocation9 [shape = 'u8[8192]{0}', space=vmem, size = 0x2000, scoped, tag = 'output window, operand 0']
    %8 = vsyncpa [#allocation3], 0
    %s9 = scalar_lea.sflag [#allocation3], 1
    %10 = vsyncpa %s9, 0
    %11 = vsyncpa [#allocation5], 0
    %12 = vsyncpa [#allocation6], 0
    %13 = vsyncpa [#allocation4], 0
    %s14 = scalar_lea.sflag [#allocation4], 1
    %15 = vsyncpa %s14, 0
    loop: start=0, step=1, limit=4
    $region2: #{tpu_custom_call.1} parent=1 // loop_pre_header
      _
    $region3: #{tpu_custom_call.1} parent=1 // loop_header
      %s17 = sphi 0, %s21
      %p18 = scmp.ge.s32.totalorder %s17, 4
      %s24 = sphi 0, %s36
      %s25 = sphi 0, %s32
      %s26 = sphi 0, %s24
      %s27 = sphi 0, %s25
      %s28 = sphi 0, %s26
      %s29 = sphi 0, %s27
      %s41 = sphi 0, %s43
      %s44 = sphi 0, %s41
      %s45 = sphi 0, %s44
      %s61 = sphi 0, %s45
      %s65 = sphi 0, %s65
      %s67 = sphi 0, %s65
      %s68 = sphi 0, %s67
      %s82 = sphi 0, %s68
      %s86 = sphi 0, %s86
      %s88 = sphi 0, %s86
      %s89 = sphi 0, %s88
      %s103 = sphi 0, %s89
      %s111 = sphi 0, %s113
      %s114 = sphi 0, %s111
      %s115 = sphi 0, %s114
      %s131 = sphi 0, %s115
    $region4: #{tpu_custom_call.1} parent=1 // loop_header_branch
      %20 = sbr.rel (%p18) target = $region8
    $region5: #{tpu_custom_call.1} parent=1 // loop_body
      %s22 = ssub.s32 %s17, 1
      %s23 = ssub.s32 %s17, 2
      %s30 = sadd.s32 1, %s25
      %p31 = scmp.ge.s32.totalorder %s30, 1
      %s32 = scalar_select %p31, 0, %s30
      %s33 = sadd.s32 1, %s24
      %s34 = scalar_select %p31, %s33, %s24
      %p35 = scmp.ge.s32.totalorder %s34, 2
      %s36 = scalar_select %p35, 0, %s34
      %s37 = ssub.s32 %s24, %s36
      %s38 = ssub.s32 %s25, %s32
      %s39 = sor.u32 %s37, %s38
      %p40 = scmp.eq.s32.totalorder %s39, 0
      %s42 = sadd.s32 %s41, 1
      %s43 = scalar_select %p40, %s41, %s42
      %p46 = pneg %p40
      %p47 = scmp.eq.s32.totalorder %s17, 1
      %p48 = por %p46, %p47
      %p49 = scmp.ne.s32.totalorder %s41, %s44
      %p50 = scmp.eq.s32.totalorder %s17, 0
      %p51 = por %p49, %p50
      %p52 = scmp.ne.s32.totalorder %s41, %s44
      %p53 = scmp.eq.s32.totalorder %s22, 1
      %p54 = por %p52, %p53
      %p55 = scmp.ne.s32.totalorder %s44, %s45
      %p56 = scmp.eq.s32.totalorder %s22, 0
      %p57 = por %p55, %p56
      %p58 = scmp.ne.s32.totalorder %s44, %s45
      %p59 = scmp.eq.s32.totalorder %s23, 1
      %p60 = por %p58, %p59
      %p62 = scmp.ne.s32.totalorder %s45, %s61
      %p63 = scmp.eq.s32.totalorder %s23, 0
      %p64 = por %p62, %p63
      %s66 = sadd.s32 %s65, 1
      %p69 = scmp.eq.s32.totalorder %s17, 1
      %p70 = scmp.ne.s32.totalorder %s65, %s67
      %p71 = scmp.eq.s32.totalorder %s17, 0
      %p72 = por %p70, %p71
      %p73 = scmp.ne.s32.totalorder %s65, %s67
      %p74 = scmp.eq.s32.totalorder %s22, 1
      %p75 = por %p73, %p74
      %p76 = scmp.ne.s32.totalorder %s67, %s68
      %p77 = scmp.eq.s32.totalorder %s22, 0
      %p78 = por %p76, %p77
      %p79 = scmp.ne.s32.totalorder %s67, %s68
      %p80 = scmp.eq.s32.totalorder %s23, 1
      %p81 = por %p79, %p80
      %p83 = scmp.ne.s32.totalorder %s68, %s82
      %p84 = scmp.eq.s32.totalorder %s23, 0
      %p85 = por %p83, %p84
      %s87 = sadd.s32 %s86, 1
      %p90 = scmp.eq.s32.totalorder %s17, 1
      %p91 = scmp.ne.s32.totalorder %s86, %s88
      %p92 = scmp.eq.s32.totalorder %s17, 0
      %p93 = por %p91, %p92
      %p94 = scmp.ne.s32.totalorder %s86, %s88
      %p95 = scmp.eq.s32.totalorder %s22, 1
      %p96 = por %p94, %p95
      %p97 = scmp.ne.s32.totalorder %s88, %s89
      %p98 = scmp.eq.s32.totalorder %s22, 0
      %p99 = por %p97, %p98
      %p100 = scmp.ne.s32.totalorder %s88, %s89
      %p101 = scmp.eq.s32.totalorder %s23, 1
      %p102 = por %p100, %p101
      %p104 = scmp.ne.s32.totalorder %s89, %s103
      %p105 = scmp.eq.s32.totalorder %s23, 0
      %p106 = por %p104, %p105
      %s107 = ssub.s32 %s24, %s36
      %s108 = ssub.s32 %s25, %s32
      %s109 = sor.u32 %s107, %s108
      %p110 = scmp.eq.s32.totalorder %s109, 0
      %s112 = sadd.s32 %s111, 1
      %s113 = scalar_select %p110, %s111, %s112
      %p116 = pneg %p110
      %p117 = scmp.eq.s32.totalorder %s17, 1
      %p118 = por %p116, %p117
      %p119 = scmp.ne.s32.totalorder %s111, %s114
      %p120 = scmp.eq.s32.totalorder %s17, 0
      %p121 = por %p119, %p120
      %p122 = scmp.ne.s32.totalorder %s111, %s114
      %p123 = scmp.eq.s32.totalorder %s22, 1
      %p124 = por %p122, %p123
      %p125 = scmp.ne.s32.totalorder %s114, %s115
      %p126 = scmp.eq.s32.totalorder %s22, 0
      %p127 = por %p125, %p126
      %p128 = scmp.ne.s32.totalorder %s114, %s115
      %p129 = scmp.eq.s32.totalorder %s23, 1
      %p130 = por %p128, %p129
      %p132 = scmp.ne.s32.totalorder %s115, %s131
      %p133 = scmp.eq.s32.totalorder %s23, 0
      %p134 = por %p132, %p133
      %p135 = scmp.le.s32.totalorder 1, %s17
      %p136 = scmp.lt.s32.totalorder %s17, 3
      %p137 = pnand %p135, %p136
      %p138 = pneg %p137
      // Predicated region
      $region9: #{tpu_custom_call.1} parent=5 // pred_check
        _
      $region10: #{tpu_custom_call.1} parent=5 // pred_check_branch
        %140 = sbr.rel (%p137) target = $region12
      $region11: #{tpu_custom_call.1} parent=5 // pred_region
        %s141 = ssub.s32 %s17, 1
        // Predicated region
        $region13: #{tpu_custom_call.1} parent=11 // pred_check
          %p142 = pneg %p78
        $region14: #{tpu_custom_call.1} parent=11 // pred_check_branch
          %144 = sbr.rel (%p142) target = $region16
        $region15: #{tpu_custom_call.1} parent=11 // pred_region
          %s146 = ssub.s32 64, 64
          %147 = vsyncadd [#allocation5], %s146
          %150 = dma.hbm_to_smem %s1, 64, [#allocation7], [#allocation5]
        $region16: #{tpu_custom_call.1} parent=11 // pred_fallthru
          _
        // Predicated region
        $region17: #{tpu_custom_call.1} parent=11 // pred_check
          %p151 = pneg %p99
        $region18: #{tpu_custom_call.1} parent=11 // pred_check_branch
          %153 = sbr.rel (%p151) target = $region20
        $region19: #{tpu_custom_call.1} parent=11 // pred_region
          %s155 = ssub.s32 16, 16
          %156 = vsyncadd [#allocation6], %s155
          %s158 = sshll.u32 %s2, 4
          %s159 = int_to_ptr.vmem [resolvable:$true] %s158
          %161 = dma.vmem_to_smem %s159, 16, [#allocation8], [#allocation6]
        $region20: #{tpu_custom_call.1} parent=11 // pred_fallthru
          _
      $region12: #{tpu_custom_call.1} parent=5 // pred_fallthru
        _
      %p162 = scmp.lt.s32.totalorder %s17, 2
      // Predicated region
      $region21: #{tpu_custom_call.1} parent=5 // pred_check
        %p163 = pneg %p162
      $region22: #{tpu_custom_call.1} parent=5 // pred_check_branch
        %165 = sbr.rel (%p163) target = $region24
      $region23: #{tpu_custom_call.1} parent=5 // pred_region
        // Predicated region
        $region25: #{tpu_custom_call.1} parent=23 // pred_check
          %p166 = pneg %p51
        $region26: #{tpu_custom_call.1} parent=23 // pred_check_branch
          %168 = sbr.rel (%p166) target = $region28
        $region27: #{tpu_custom_call.1} parent=23 // pred_region
          %s169 = sand.u32 %s41, 1
          %s170 = scalar_lea.sflag [#allocation3], %s169
          %s171 = sand.u32 %s41, 1
          %s172 = smul.addr %s171, 8
          %s173 = scalar_lea.vmem [#allocation2], %s172
          %s175 = ssub.s32 128, 128
          %176 = vsyncadd %s170, %s175
          %s177 = smul.addr %s24, 4
          %s178 = sadd.s32 %s25, %s177
          %s179 = smul.addr %s178, 32
          %s180 = scalar_lea.hbm %s0, %s179
          %s181 = sshll.u32 %s173, 4
          %s182 = int_to_ptr.vmem [resolvable:$true] %s181
          %187 = dma.hbm_to_vmem [thread:$0]  %s180, 128, %s182, %s170, 32, 32, 2
        $region28: #{tpu_custom_call.1} parent=23 // pred_fallthru
          _
      $region24: #{tpu_custom_call.1} parent=5 // pred_fallthru
        _
      %p188 = scmp.le.s32.totalorder 1, %s17
      %p189 = scmp.lt.s32.totalorder %s17, 3
      %p190 = pnand %p188, %p189
      %p191 = pneg %p190
      // Predicated region
      $region29: #{tpu_custom_call.1} parent=5 // pred_check
        _
      $region30: #{tpu_custom_call.1} parent=5 // pred_check_branch
        %193 = sbr.rel (%p190) target = $region32
      $region31: #{tpu_custom_call.1} parent=5 // pred_region
        %s194 = ssub.s32 %s17, 1
        %s195 = sand.u32 %s44, 1
        %s196 = scalar_lea.sflag [#allocation3], %s195
        %s197 = sand.u32 %s44, 1
        %s198 = smul.addr %s197, 8
        %s199 = scalar_lea.vmem [#allocation2], %s198
        // Predicated region
        $region33: #{tpu_custom_call.1} parent=31 // pred_check
          %p200 = pneg %p57
        $region34: #{tpu_custom_call.1} parent=31 // pred_check_branch
          %202 = sbr.rel (%p200) target = $region36
        $region35: #{tpu_custom_call.1} parent=31 // pred_region
          %203 = dma.done %s196, 128
        $region36: #{tpu_custom_call.1} parent=31 // pred_fallthru
          _
        // Predicated region
        $region37: #{tpu_custom_call.1} parent=31 // pred_check
          %p204 = pneg %p78
        $region38: #{tpu_custom_call.1} parent=31 // pred_check_branch
          %206 = sbr.rel (%p204) target = $region40
        $region39: #{tpu_custom_call.1} parent=31 // pred_region
          %207 = dma.done [#allocation5], 64
        $region40: #{tpu_custom_call.1} parent=31 // pred_fallthru
          _
        // Predicated region
        $region41: #{tpu_custom_call.1} parent=31 // pred_check
          %p208 = pneg %p99
        $region42: #{tpu_custom_call.1} parent=31 // pred_check_branch
          %210 = sbr.rel (%p208) target = $region44
        $region43: #{tpu_custom_call.1} parent=31 // pred_region
          %211 = dma.done [#allocation6], 16
        $region44: #{tpu_custom_call.1} parent=31 // pred_fallthru
          _
        %212 = sfence
        %s213 = sand.u32 %s44, 1
        %s214 = scalar_lea.sflag [#allocation3], %s213
        %s215 = sand.u32 %s44, 1
        %s216 = smul.addr %s215, 8
        %s217 = scalar_lea.vmem [#allocation2], %s216
        %p218 = pneg %p57
        %p219 = pneg %p54
        %p220 = pneg %p78
        %p221 = pneg %p75
        %p222 = pneg %p99
        %p223 = pneg %p96
        %p224 = pneg %p127
        %p225 = pneg %p124
        %s226 = sand.u32 %s114, 1
        %s227 = scalar_lea.sflag [#allocation4], %s226
        %s228 = sand.u32 %s114, 1
        %s229 = smul.addr %s228, 8
        %s230 = scalar_lea.vmem [#allocation9], %s229
        %v231 = vld [vmem:[%s199] sm:$0x3]
        %s232 = sld [smem:[#allocation8]]
        %v233 = vstv %s232
        %v234 = vadd.f32 %v231, %v233
        %s235 = sld [smem:[#allocation7]]
        %v236 = vstv %s235
        %v237 = vmul.f32 %v236, %v231
        %v238 = vadd.f32 %v234, %v237
        %s239 = sld [smem:[#allocation7 + $0x1]]
        %s240 = scalar_lea.vmem %s199, 2 [#allocation2]
        %v241 = vld [vmem:[%s240] sm:$0x3]
        %v242 = vstv %s239
        %v243 = vmul.f32 %v242, %v241
        %v244 = vadd.f32 %v238, %v243
        %s245 = sld [smem:[#allocation7 + $0x2]]
        %s246 = scalar_lea.vmem %s199, 4 [#allocation2]
        %v247 = vld [vmem:[%s246] sm:$0x3]
        %v248 = vstv %s245
        %v249 = vmul.f32 %v248, %v247
        %v250 = vadd.f32 %v244, %v249
        %s251 = sld [smem:[#allocation7 + $0x3]]
        %s252 = scalar_lea.vmem %s199, 6 [#allocation2]
        %v253 = vld [vmem:[%s252] sm:$0x3]
        %v254 = vstv %s251
        %v255 = vmul.f32 %v254, %v253
        %v256 = vadd.f32 %v250, %v255
        %257 = vst [vmem:[%s230] sm:$0x3] %v256
        %v258 = vld [vmem:[%s240] sm:$0x3]
        %s259 = sld [smem:[#allocation8 + $0x1]]
        %v260 = vstv %s259
        %v261 = vadd.f32 %v258, %v260
        %s262 = sld [smem:[#allocation7 + $0x80]]
        %v263 = vld [vmem:[%s199] sm:$0x3]
        %v264 = vstv %s262
        %v265 = vmul.f32 %v264, %v263
        %v266 = vadd.f32 %v261, %v265
        %s267 = sld [smem:[#allocation7 + $0x81]]
        %v268 = vstv %s267
        %v269 = vmul.f32 %v268, %v258
        %v270 = vadd.f32 %v266, %v269
        %s271 = sld [smem:[#allocation7 + $0x82]]
        %v272 = vld [vmem:[%s246] sm:$0x3]
        %v273 = vstv %s271
        %v274 = vmul.f32 %v273, %v272
        %v275 = vadd.f32 %v270, %v274
        %s276 = sld [smem:[#allocation7 + $0x83]]
        %v277 = vld [vmem:[%s252] sm:$0x3]
        %v278 = vstv %s276
        %v279 = vmul.f32 %v278, %v277
        %v280 = vadd.f32 %v275, %v279
        %s281 = scalar_lea.vmem %s230, 2 [#allocation9]
        %282 = vst [vmem:[%s281] sm:$0x3] %v280
        %v283 = vld [vmem:[%s246] sm:$0x3]
        %s284 = sld [smem:[#allocation8 + $0x2]]
        %v285 = vstv %s284
        %v286 = vadd.f32 %v283, %v285
        %s287 = sld [smem:[#allocation7 + $0x100]]
        %v288 = vld [vmem:[%s199] sm:$0x3]
        %v289 = vstv %s287
        %v290 = vmul.f32 %v289, %v288
        %v291 = vadd.f32 %v286, %v290
        %s292 = sld [smem:[#allocation7 + $0x101]]
        %v293 = vld [vmem:[%s240] sm:$0x3]
        %v294 = vstv %s292
        %v295 = vmul.f32 %v294, %v293
        %v296 = vadd.f32 %v291, %v295
        %s297 = sld [smem:[#allocation7 + $0x102]]
        %v298 = vstv %s297
        %v299 = vmul.f32 %v298, %v283
        %v300 = vadd.f32 %v296, %v299
        %s301 = sld [smem:[#allocation7 + $0x103]]
        %v302 = vld [vmem:[%s252] sm:$0x3]
        %v303 = vstv %s301
        %v304 = vmul.f32 %v303, %v302
        %v305 = vadd.f32 %v300, %v304
        %s306 = scalar_lea.vmem %s230, 4 [#allocation9]
        %307 = vst [vmem:[%s306] sm:$0x3] %v305
        %v308 = vld [vmem:[%s252] sm:$0x3]
        %s309 = sld [smem:[#allocation8 + $0x3]]
        %v310 = vstv %s309
        %v311 = vadd.f32 %v308, %v310
        %s312 = sld [smem:[#allocation7 + $0x180]]
        %v313 = vld [vmem:[%s199] sm:$0x3]
        %v314 = vstv %s312
        %v315 = vmul.f32 %v314, %v313
        %v316 = vadd.f32 %v311, %v315
        %s317 = sld [smem:[#allocation7 + $0x181]]
        %v318 = vld [vmem:[%s240] sm:$0x3]
        %v319 = vstv %s317
        %v320 = vmul.f32 %v319, %v318
        %v321 = vadd.f32 %v316, %v320
        %s322 = sld [smem:[#allocation7 + $0x182]]
        %v323 = vld [vmem:[%s246] sm:$0x3]
        %v324 = vstv %s322
        %v325 = vmul.f32 %v324, %v323
        %v326 = vadd.f32 %v321, %v325
        %s327 = sld [smem:[#allocation7 + $0x183]]
        %v328 = vstv %s327
        %v329 = vmul.f32 %v328, %v308
        %v330 = vadd.f32 %v326, %v329
        %s331 = scalar_lea.vmem %s230, 6 [#allocation9]
        %332 = vst [vmem:[%s331] sm:$0x3] %v330
        %s333 = sand.u32 %s114, 1
        %s334 = scalar_lea.sflag [#allocation4], %s333
        %s335 = sand.u32 %s114, 1
        %s336 = smul.addr %s335, 8
        %s337 = scalar_lea.vmem [#allocation9], %s336
        // Predicated region
        $region45: #{tpu_custom_call.1} parent=31 // pred_check
          %p338 = pneg %p124
        $region46: #{tpu_custom_call.1} parent=31 // pred_check_branch
          %340 = sbr.rel (%p338) target = $region48
        $region47: #{tpu_custom_call.1} parent=31 // pred_region
          %s342 = ssub.s32 128, 128
          %343 = vsyncadd %s334, %s342
          %s344 = smul.addr %s26, 4
          %s345 = sadd.s32 %s27, %s344
          %s346 = smul.addr %s345, 32
          %s347 = scalar_lea.hbm %s3, %s346
          %s348 = sshll.u32 %s337, 4
          %s349 = int_to_ptr.vmem [resolvable:$true] %s348
          %354 = dma.vmem_to_hbm [thread:$0]  %s349, 128, %s347, %s334, 32, 32, 2
        $region48: #{tpu_custom_call.1} parent=31 // pred_fallthru
          _
      $region32: #{tpu_custom_call.1} parent=5 // pred_fallthru
        _
      %p355 = scmp.le.s32.totalorder 2, %s17
      // Predicated region
      $region49: #{tpu_custom_call.1} parent=5 // pred_check
        %p356 = pneg %p355
      $region50: #{tpu_custom_call.1} parent=5 // pred_check_branch
        %358 = sbr.rel (%p356) target = $region52
      $region51: #{tpu_custom_call.1} parent=5 // pred_region
        %s359 = ssub.s32 %s17, 2
        // Predicated region
        $region53: #{tpu_custom_call.1} parent=51 // pred_check
          %p360 = pneg %p130
        $region54: #{tpu_custom_call.1} parent=51 // pred_check_branch
          %362 = sbr.rel (%p360) target = $region56
        $region55: #{tpu_custom_call.1} parent=51 // pred_region
          %s363 = sand.u32 %s115, 1
          %s364 = scalar_lea.sflag [#allocation4], %s363
          %s365 = sand.u32 %s115, 1
          %s366 = smul.addr %s365, 8
          %s367 = scalar_lea.vmem [#allocation9], %s366
          %368 = dma.done %s364, 128
        $region56: #{tpu_custom_call.1} parent=51 // pred_fallthru
          _
      $region52: #{tpu_custom_call.1} parent=5 // pred_fallthru
        _
    $region6: #{tpu_custom_call.1} parent=1 // loop_footer
      %s21 = sadd.s32 1, %s17
    $region7: #{tpu_custom_call.1} parent=1 // loop_footer_branch
      %16 = sbr.rel target = $region3
    $region8: #{tpu_custom_call.1} parent=1 // loop_exit
      _
    %369 = vsyncpa [#allocation3], 1
    %s370 = scalar_lea.sflag [#allocation3], 1
    %371 = vsyncpa %s370, 1
    %372 = vsyncpa [#allocation4], 1
    %s373 = scalar_lea.sflag [#allocation4], 1
    %374 = vsyncpa %s373, 1
    %375 = vsyncpa [#allocation5], 1
    %s376 = scalar_lea.sflag [#allocation5], 1
    %377 = vsyncpa %s376, 1
    %378 = vsyncpa [#allocation6], 1
    %s379 = scalar_lea.sflag [#allocation6], 1
    %380 = vsyncpa %s379, 1

</llo_original>
